<compile_context>
chip_gen: v6e
topology: v6e:2x2x1
jax: 0.10.0
libtpu: 0.0.40
codegen_flags: <defaults>
</compile_context>

<pallas_src>
import jax
import jax.numpy as jnp
from jax.experimental import pallas as pl
from jax.experimental.pallas import tpu as pltpu

NEG_SLOPE = 0.01  # F.leaky_relu default negative_slope


def _leaky_relu(x):
    return jnp.where(x > 0, x, NEG_SLOPE * x)


def _round_up(x, m):
    return ((x + m - 1) // m) * m


def mlp_decoder_kernel(row_ref, col_ref, custp_ref, varp_ref,
                       w2_ref, b2_ref, wo_ref, bo_ref, out_ref):
    """One edge-tile of the MLP decoder.

    row_ref/col_ref : (TE, 1) int32 edge endpoints
    custp_ref       : (Ncust, H1) bf16  == customer @ W1[:C] + b1  (layer-1 folded)
    varp_ref        : (Nvar,  H1) bf16  == variant  @ W1[C:]
    w2_ref          : (H1, H2) bf16,  b2_ref: (1, H2) f32
    wo_ref          : (1, H2) f32 (output weight, transposed), bo_ref: (1, 1) f32
    out_ref         : (TE, 2) f32
    """
    te = row_ref.shape[0]
    n_cust = custp_ref.shape[0]
    n_var = varp_ref.shape[0]
    cdt = custp_ref.dtype  # MXU operand dtype (bf16)

    row = row_ref[...]  # (te, 1) int32
    col = col_ref[...]  # (te, 1) int32

    # --- layer 1, fused with the row/col gather -----------------------------
    # gather(X)[e] @ W == onehot(e) @ (X @ W); the projected tables are resident.
    iota_c = jax.lax.broadcasted_iota(jnp.int32, (te, n_cust), 1)
    iota_v = jax.lax.broadcasted_iota(jnp.int32, (te, n_var), 1)
    oh_r = jnp.where(row == iota_c, 1.0, 0.0).astype(cdt)   # (te, Ncust)
    oh_c = jnp.where(col == iota_v, 1.0, 0.0).astype(cdt)   # (te, Nvar)

    h = jnp.dot(oh_r, custp_ref[...], preferred_element_type=jnp.float32)
    h = h + jnp.dot(oh_c, varp_ref[...], preferred_element_type=jnp.float32)
    h = _leaky_relu(h)                                       # (te, H1) f32 (b1 folded)

    # --- layer 2 (bf16 operands, f32 accumulation) ---------------------------
    h = jnp.dot(h.astype(cdt), w2_ref[...], preferred_element_type=jnp.float32)
    h = _leaky_relu(h + b2_ref[...])                         # (te, H2) f32

    # --- output layer: N=1 matmul as VPU mul + lane reduce -------------------
    logit = jnp.sum(h * wo_ref[...], axis=-1, keepdims=True) + bo_ref[...]  # (te, 1)
    p = jax.nn.sigmoid(logit)

    # torch.cat([p, 1 - p], dim=1)
    out_ref[...] = jnp.concatenate([p, 1.0 - p], axis=1).astype(out_ref.dtype)


def mlp_decoder_pallas(row, col, cust_proj, var_proj, w2, b2, wo_row, bo,
                       *, tile_e=1024):
    E = row.shape[0]
    n_cust, h1 = cust_proj.shape
    n_var = var_proj.shape[0]
    h2 = w2.shape[1]

    # Edge tile: big (amortize pipeline overhead), but
    #  - keep >= 2 grid steps so megacore / dual-TC chips can split the grid,
    #  - keep the per-tile one-hot operands (te x (Ncust+Nvar) bf16) under ~8 MiB.
    te = min(tile_e, max(8, _round_up(pl.cdiv(E, 2), 8)))
    vmem_cap = max(8, ((8 * 1024 * 1024) // max(1, 2 * (n_cust + n_var))) // 8 * 8)
    te = min(te, vmem_cap)
    te = max(8, (te // 8) * 8)            # sublane-aligned
    e_pad = _round_up(E, te)
    grid = e_pad // te

    # Ragged tail: pad the (tiny) int32 index streams, slice the output back.
    row_p = jnp.zeros((e_pad, 1), jnp.int32).at[:E, 0].set(row.astype(jnp.int32))
    col_p = jnp.zeros((e_pad, 1), jnp.int32).at[:E, 0].set(col.astype(jnp.int32))

    out = pl.pallas_call(
        mlp_decoder_kernel,
        out_shape=jax.ShapeDtypeStruct((e_pad, 2), jnp.float32),
        grid_spec=pltpu.PrefetchScalarGridSpec(
            num_scalar_prefetch=0,
            grid=(grid,),
            in_specs=[
                pl.BlockSpec((te, 1), lambda i: (i, 0)),        # row indices
                pl.BlockSpec((te, 1), lambda i: (i, 0)),        # col indices
                pl.BlockSpec((n_cust, h1), lambda i: (0, 0)),   # resident tables /
                pl.BlockSpec((n_var, h1), lambda i: (0, 0)),    # weights: constant
                pl.BlockSpec((h1, h2), lambda i: (0, 0)),       # index_map => no
                pl.BlockSpec((1, h2), lambda i: (0, 0)),        # re-DMA per step
                pl.BlockSpec((1, h2), lambda i: (0, 0)),
                pl.BlockSpec((1, 1), lambda i: (0, 0)),
            ],
            out_specs=pl.BlockSpec((te, 2), lambda i: (i, 0)),
        ),
        compiler_params=pltpu.CompilerParams(
            dimension_semantics=("parallel",),
            vmem_limit_bytes=32 * 1024 * 1024),
    )(row_p, col_p, cust_proj, var_proj, w2, b2, wo_row, bo)
    return out[:E]


def mlp_decoder_forward(x_dict, edge_label_index, params, *, tile_e=1024,
                        compute_dtype=jnp.bfloat16):
    """Glue: fold layer-1 (and b1) into the node tables (exact), then run the kernel."""
    w1, b1, w2, b2, wo, bo = params
    c = x_dict["customer"].shape[1]
    hp = jax.lax.Precision.HIGHEST

    # Exact refactoring: customer[row] @ W1[:C] == (customer @ W1[:C])[row].
    cust_proj = (jnp.dot(x_dict["customer"], w1[:c], precision=hp)
                 + b1).astype(compute_dtype)
    var_proj = jnp.dot(x_dict["variant"], w1[c:], precision=hp).astype(compute_dtype)

    row, col = edge_label_index
    return mlp_decoder_pallas(
        row, col, cust_proj, var_proj,
        w2.astype(compute_dtype),
        b2.astype(jnp.float32),
        wo.reshape(1, -1).astype(jnp.float32),   # (1, H2) for the VPU reduce
        bo.astype(jnp.float32),
        tile_e=tile_e)


def _reference(x_dict, edge_label_index, params):
    row, col = edge_label_index
    x = jnp.concatenate(
        [x_dict["customer"][row], x_dict["variant"][col]], axis=-1)
    w1, b1, w2, b2, wo, bo = params
    hp = jax.lax.Precision.HIGHEST
    h = _leaky_relu(jnp.dot(x, w1, precision=hp) + b1)
    h = _leaky_relu(jnp.dot(h, w2, precision=hp) + b2)
    p = jax.nn.sigmoid(jnp.dot(h, wo, precision=hp) + bo)
    return jnp.concatenate([p, 1.0 - p], axis=1)


if __name__ == "__main__":
    key = jax.random.PRNGKey(0)
    ks = jax.random.split(key, 10)

    # small shapes consistent with the module
    input_channels = 4
    hidden_channels = [32, 16]
    n_customers, n_variants = 8, 8
    num_edges = 37                    # deliberately NOT a multiple of the tile

    customer = jax.random.normal(ks[0], (n_customers, input_channels), jnp.float32)
    variant = jax.random.normal(ks[1], (n_variants, input_channels), jnp.float32)
    x_dict = {"customer": customer, "variant": variant}

    row = jax.random.randint(ks[2], (num_edges,), 0, n_customers)
    col = jax.random.randint(ks[3], (num_edges,), 0, n_variants)
    edge_label_index = (row, col)

    # deterministic parameter init (Linear weights stored as (in, out) = W^T)
    din = 2 * input_channels
    h1, h2 = hidden_channels
    s = 0.1
    w1 = s * jax.random.normal(ks[4], (din, h1), jnp.float32)
    b1 = s * jax.random.normal(ks[5], (1, h1), jnp.float32)
    w2 = s * jax.random.normal(ks[6], (h1, h2), jnp.float32)
    b2 = s * jax.random.normal(ks[7], (1, h2), jnp.float32)
    wo = s * jax.random.normal(ks[8], (h2, 1), jnp.float32)
    bo = s * jax.random.normal(ks[9], (1, 1), jnp.float32)
    params = (w1, b1, w2, b2, wo, bo)

    out = mlp_decoder_forward(x_dict, edge_label_index, params)
    out = jax.block_until_ready(out)

    ref = _reference(x_dict, edge_label_index, params)
    assert out.shape == (num_edges, 2)
    # bf16 operand streams (f32 accumulation) -> relaxed tolerance vs f32 reference
    assert jnp.allclose(out, ref, atol=2e-2, rtol=2e-2)
    assert jnp.allclose(out.sum(axis=1), 1.0, atol=1e-5)

    print("KERNEL_OK")
</pallas_src>

<mosaic_0001>
module attributes {stable_mosaic.version = 11 : i64} {
  func.func @mlp_decoder_kernel(%arg0: i32, %arg1: memref<24x1xi32, #tpu.memory_space<vmem>>, %arg2: memref<24x1xi32, #tpu.memory_space<vmem>>, %arg3: memref<8x32xbf16, #tpu.memory_space<vmem>>, %arg4: memref<8x32xbf16, #tpu.memory_space<vmem>>, %arg5: memref<32x16xbf16, #tpu.memory_space<vmem>>, %arg6: memref<1x16xf32, #tpu.memory_space<vmem>>, %arg7: memref<1x16xf32, #tpu.memory_space<vmem>>, %arg8: memref<1x1xf32, #tpu.memory_space<vmem>>, %arg9: memref<24x2xf32, #tpu.memory_space<vmem>>) attributes {dimension_semantics = [#tpu.dimension_semantics<parallel>], iteration_bounds = array<i64: 2>, scalar_prefetch = 0 : i64, scratch_operands = 0 : i64, tpu.core_type = #tpu.core_type<tc>, window_params = [{transform_indices = @transform_0, window_bounds = array<i64: 24, 1>}, {transform_indices = @transform_1, window_bounds = array<i64: 24, 1>}, {pipeline_mode = #tpu.pipeline_mode<synchronous>, transform_indices = @transform_2, window_bounds = array<i64: 8, 32>}, {pipeline_mode = #tpu.pipeline_mode<synchronous>, transform_indices = @transform_3, window_bounds = array<i64: 8, 32>}, {pipeline_mode = #tpu.pipeline_mode<synchronous>, transform_indices = @transform_4, window_bounds = array<i64: 32, 16>}, {pipeline_mode = #tpu.pipeline_mode<synchronous>, transform_indices = @transform_5, window_bounds = array<i64: 1, 16>}, {pipeline_mode = #tpu.pipeline_mode<synchronous>, transform_indices = @transform_6, window_bounds = array<i64: 1, 16>}, {pipeline_mode = #tpu.pipeline_mode<synchronous>, transform_indices = @transform_7, window_bounds = array<i64: 1, 1>}, {transform_indices = @transform_8, window_bounds = array<i64: 24, 2>}]} {
    %c0 = arith.constant 0 : index
    %c0_0 = arith.constant 0 : index
    %0 = vector.load %arg1[%c0, %c0_0] : memref<24x1xi32, #tpu.memory_space<vmem>>, vector<24x1xi32>
    %c0_1 = arith.constant 0 : index
    %c0_2 = arith.constant 0 : index
    %1 = vector.load %arg2[%c0_1, %c0_2] : memref<24x1xi32, #tpu.memory_space<vmem>>, vector<24x1xi32>
    %2 = tpu.iota {dimensions = array<i32: 1>} : vector<24x8xi32>
    %3 = tpu.iota {dimensions = array<i32: 1>} : vector<24x8xi32>
    %4 = vector.broadcast %0 : vector<24x1xi32> to vector<24x8xi32>
    %5 = arith.cmpi eq, %4, %2 : vector<24x8xi32>
    %cst = arith.constant 1.000000e+00 : f32
    %cst_3 = arith.constant 0.000000e+00 : f32
    %6 = vector.broadcast %cst : f32 to vector<24x8xf32>
    %7 = vector.broadcast %cst_3 : f32 to vector<24x8xf32>
    %8 = arith.select %5, %6, %7 : vector<24x8xi1>, vector<24x8xf32>
    %9 = arith.truncf %8 : vector<24x8xf32> to vector<24x8xbf16>
    %10 = vector.broadcast %1 : vector<24x1xi32> to vector<24x8xi32>
    %11 = arith.cmpi eq, %10, %3 : vector<24x8xi32>
    %cst_4 = arith.constant 1.000000e+00 : f32
    %cst_5 = arith.constant 0.000000e+00 : f32
    %12 = vector.broadcast %cst_4 : f32 to vector<24x8xf32>
    %13 = vector.broadcast %cst_5 : f32 to vector<24x8xf32>
    %14 = arith.select %11, %12, %13 : vector<24x8xi1>, vector<24x8xf32>
    %15 = arith.truncf %14 : vector<24x8xf32> to vector<24x8xbf16>
    %c0_6 = arith.constant 0 : index
    %c0_7 = arith.constant 0 : index
    %16 = vector.load %arg3[%c0_6, %c0_7] : memref<8x32xbf16, #tpu.memory_space<vmem>>, vector<8x32xbf16>
    %cst_8 = arith.constant dense<0.000000e+00> : vector<24x32xf32>
    %17 = tpu.matmul %9, %16, %cst_8 {dimension_numbers = #tpu.dot_dimension_numbers<[1], [0], [0], [1], [0, 0, 1, 1], [], []>} : vector<24x8xbf16>, vector<8x32xbf16>, vector<24x32xf32> -> vector<24x32xf32>
    %c0_9 = arith.constant 0 : index
    %c0_10 = arith.constant 0 : index
    %18 = vector.load %arg4[%c0_9, %c0_10] : memref<8x32xbf16, #tpu.memory_space<vmem>>, vector<8x32xbf16>
    %cst_11 = arith.constant dense<0.000000e+00> : vector<24x32xf32>
    %19 = tpu.matmul %15, %18, %cst_11 {dimension_numbers = #tpu.dot_dimension_numbers<[1], [0], [0], [1], [0, 0, 1, 1], [], []>} : vector<24x8xbf16>, vector<8x32xbf16>, vector<24x32xf32> -> vector<24x32xf32>
    %20 = arith.addf %17, %19 : vector<24x32xf32>
    %cst_12 = arith.constant 0.000000e+00 : f32
    %21 = vector.broadcast %cst_12 : f32 to vector<24x32xf32>
    %22 = arith.cmpf ogt, %20, %21 : vector<24x32xf32>
    %cst_13 = arith.constant 0.00999999977 : f32
    %23 = vector.broadcast %cst_13 : f32 to vector<24x32xf32>
    %24 = arith.mulf %23, %20 : vector<24x32xf32>
    %25 = arith.select %22, %20, %24 : vector<24x32xi1>, vector<24x32xf32>
    %26 = arith.truncf %25 : vector<24x32xf32> to vector<24x32xbf16>
    %c0_14 = arith.constant 0 : index
    %c0_15 = arith.constant 0 : index
    %27 = vector.load %arg5[%c0_14, %c0_15] : memref<32x16xbf16, #tpu.memory_space<vmem>>, vector<32x16xbf16>
    %cst_16 = arith.constant dense<0.000000e+00> : vector<24x16xf32>
    %28 = tpu.matmul %26, %27, %cst_16 {dimension_numbers = #tpu.dot_dimension_numbers<[1], [0], [0], [1], [0, 0, 1, 1], [], []>} : vector<24x32xbf16>, vector<32x16xbf16>, vector<24x16xf32> -> vector<24x16xf32>
    %c0_17 = arith.constant 0 : index
    %c0_18 = arith.constant 0 : index
    %29 = vector.load %arg6[%c0_17, %c0_18] : memref<1x16xf32, #tpu.memory_space<vmem>>, vector<1x16xf32>
    %30 = vector.broadcast %29 : vector<1x16xf32> to vector<24x16xf32>
    %31 = arith.addf %28, %30 : vector<24x16xf32>
    %cst_19 = arith.constant 0.000000e+00 : f32
    %32 = vector.broadcast %cst_19 : f32 to vector<24x16xf32>
    %33 = arith.cmpf ogt, %31, %32 : vector<24x16xf32>
    %cst_20 = arith.constant 0.00999999977 : f32
    %34 = vector.broadcast %cst_20 : f32 to vector<24x16xf32>
    %35 = arith.mulf %34, %31 : vector<24x16xf32>
    %36 = arith.select %33, %31, %35 : vector<24x16xi1>, vector<24x16xf32>
    %c0_21 = arith.constant 0 : index
    %c0_22 = arith.constant 0 : index
    %37 = vector.load %arg7[%c0_21, %c0_22] : memref<1x16xf32, #tpu.memory_space<vmem>>, vector<1x16xf32>
    %38 = vector.broadcast %37 : vector<1x16xf32> to vector<24x16xf32>
    %39 = arith.mulf %36, %38 : vector<24x16xf32>
    %cst_23 = arith.constant dense<0.000000e+00> : vector<24xf32>
    %40 = vector.multi_reduction <add>, %39, %cst_23 [1] : vector<24x16xf32> to vector<24xf32>
    %41 = vector.shape_cast %40 : vector<24xf32> to vector<24x1xf32>
    %c0_24 = arith.constant 0 : index
    %c0_25 = arith.constant 0 : index
    %42 = vector.load %arg8[%c0_24, %c0_25] : memref<1x1xf32, #tpu.memory_space<vmem>>, vector<1x1xf32>
    %43 = vector.broadcast %42 : vector<1x1xf32> to vector<24x1xf32>
    %44 = arith.addf %41, %43 : vector<24x1xf32>
    %45 = arith.negf %44 : vector<24x1xf32>
    %46 = math.exp %45 : vector<24x1xf32>
    %cst_26 = arith.constant 1.000000e+00 : f32
    %47 = vector.broadcast %cst_26 : f32 to vector<24x1xf32>
    %48 = arith.addf %47, %46 : vector<24x1xf32>
    %49 = arith.divf %47, %48 : vector<24x1xf32>
    %cst_27 = arith.constant 1.000000e+00 : f32
    %50 = vector.broadcast %cst_27 : f32 to vector<24x1xf32>
    %51 = arith.subf %50, %49 : vector<24x1xf32>
    %52 = tpu.concatenate %49, %51 in 1 : vector<24x1xf32>, vector<24x1xf32> -> vector<24x2xf32>
    %c0_28 = arith.constant 0 : index
    %c0_29 = arith.constant 0 : index
    %53 = vector.load %arg9[%c0_28, %c0_29] : memref<24x2xf32, #tpu.memory_space<vmem>>, vector<24x2xf32>
    tpu.vector_store %arg9[%c0_28, %c0_29], %52 {strides = array<i32>} : memref<24x2xf32, #tpu.memory_space<vmem>>, vector<24x2xf32>,
    return
  }
  func.func @transform_0(%arg0: i32) -> (i32, i32) {
    %c0_i32 = arith.constant 0 : i32
    %c0_i32_0 = arith.constant 0 : i32
    return %arg0, %c0_i32 : i32, i32
  }
  func.func @transform_1(%arg0: i32) -> (i32, i32) {
    %c0_i32 = arith.constant 0 : i32
    %c0_i32_0 = arith.constant 0 : i32
    return %arg0, %c0_i32 : i32, i32
  }
  func.func @transform_2(%arg0: i32) -> (i32, i32) {
    %c0_i32 = arith.constant 0 : i32
    %c0_i32_0 = arith.constant 0 : i32
    %c0_i32_1 = arith.constant 0 : i32
    return %c0_i32, %c0_i32_0 : i32, i32
  }
  func.func @transform_3(%arg0: i32) -> (i32, i32) {
    %c0_i32 = arith.constant 0 : i32
    %c0_i32_0 = arith.constant 0 : i32
    %c0_i32_1 = arith.constant 0 : i32
    return %c0_i32, %c0_i32_0 : i32, i32
  }
  func.func @transform_4(%arg0: i32) -> (i32, i32) {
    %c0_i32 = arith.constant 0 : i32
    %c0_i32_0 = arith.constant 0 : i32
    %c0_i32_1 = arith.constant 0 : i32
    return %c0_i32, %c0_i32_0 : i32, i32
  }
  func.func @transform_5(%arg0: i32) -> (i32, i32) {
    %c0_i32 = arith.constant 0 : i32
    %c0_i32_0 = arith.constant 0 : i32
    %c0_i32_1 = arith.constant 0 : i32
    return %c0_i32, %c0_i32_0 : i32, i32
  }
  func.func @transform_6(%arg0: i32) -> (i32, i32) {
    %c0_i32 = arith.constant 0 : i32
    %c0_i32_0 = arith.constant 0 : i32
    %c0_i32_1 = arith.constant 0 : i32
    return %c0_i32, %c0_i32_0 : i32, i32
  }
  func.func @transform_7(%arg0: i32) -> (i32, i32) {
    %c0_i32 = arith.constant 0 : i32
    %c0_i32_0 = arith.constant 0 : i32
    %c0_i32_1 = arith.constant 0 : i32
    return %c0_i32, %c0_i32_0 : i32, i32
  }
  func.func @transform_8(%arg0: i32) -> (i32, i32) {
    %c0_i32 = arith.constant 0 : i32
    %c0_i32_0 = arith.constant 0 : i32
    return %arg0, %c0_i32 : i32, i32
  }
}

</mosaic_0001>

<llo_original>
// kernel: tpu_custom_call.1
$region0: #{tpu_custom_call.1}
  #allocation0 [shape = 'u32[]', space=smem, size = 0x4, offset = 0x4, fixed_abs, tag = 'smem constant byte address 0x4 - core index']
  #allocation1 [shape = 'u32[144,128]{1,0:T(1,128)}', space=vmem, size = 0x12000, scoped, tag = 'internal scratch']
  #allocation2 [shape = 'f32[1,1]{1,0:T(1,128)S(1)}', space=vmem, size = 0x200, scoped, tag = 'scoped memory for tpu_custom_call.1']
  %s0 = inlined_call_operand.vmem [shape: s32[48,1], index: 0, kind: input, shape index: {}]
  %s1 = inlined_call_operand.vmem [shape: s32[48,1], index: 1, kind: input, shape index: {}]
  %s2 = inlined_call_operand.vmem [shape: bf16[8,32], index: 2, kind: input, shape index: {}]
  %s3 = inlined_call_operand.vmem [shape: bf16[8,32], index: 3, kind: input, shape index: {}]
  %s4 = inlined_call_operand.vmem [shape: bf16[32,16], index: 4, kind: input, shape index: {}]
  %s5 = inlined_call_operand.vmem [shape: f32[1,16], index: 5, kind: input, shape index: {}]
  %s6 = inlined_call_operand.vmem [shape: f32[1,16], index: 6, kind: input, shape index: {}]
  %s7 = inlined_call_operand.<no memory space> [shape: f32[1,1], index: 7, kind: input, shape index: {}]
  %s8 = inlined_call_operand.vmem [shape: f32[48,2], index: 8, kind: output, shape index: {}]
  %s9 = sld [smem:[#allocation0]]
  $region65: #{tpu_custom_call.1} parent=0
    _
  %s11 = ssub.s32 1, %s9
  %s12 = scalar_select 0, %s11, %s9
  %v13 = vstv %s7
  %14 = vst [vmem:[#allocation2] sm:$0x1] %v13
  loop: start=0, step=1, limit=4
  $region2: #{tpu_custom_call.1} parent=0 // loop_pre_header
    _
  $region3: #{tpu_custom_call.1} parent=0 // loop_header
    %s16 = sphi 0, %s20
    %p17 = scmp.ge.s32.totalorder %s16, 4
    %s26 = sphi 0, %s28
    %s29 = sphi 0, %s26
    %s30 = sphi 0, %s29
    %s46 = sphi 0, %s30
    %s52 = sphi 0, %s54
    %s55 = sphi 0, %s52
    %s56 = sphi 0, %s55
    %s72 = sphi 0, %s56
    %s76 = sphi 0, %s76
    %s78 = sphi 0, %s76
    %s79 = sphi 0, %s78
    %s93 = sphi 0, %s79
    %s97 = sphi 0, %s97
    %s99 = sphi 0, %s97
    %s100 = sphi 0, %s99
    %s114 = sphi 0, %s100
    %s118 = sphi 0, %s118
    %s120 = sphi 0, %s118
    %s121 = sphi 0, %s120
    %s135 = sphi 0, %s121
    %s139 = sphi 0, %s139
    %s141 = sphi 0, %s139
    %s142 = sphi 0, %s141
    %s156 = sphi 0, %s142
    %s160 = sphi 0, %s160
    %s162 = sphi 0, %s160
    %s163 = sphi 0, %s162
    %s177 = sphi 0, %s163
    %s181 = sphi 0, %s181
    %s183 = sphi 0, %s181
    %s184 = sphi 0, %s183
    %s198 = sphi 0, %s184
    %s204 = sphi 0, %s206
    %s207 = sphi 0, %s204
    %s208 = sphi 0, %s207
    %s224 = sphi 0, %s208
  $region4: #{tpu_custom_call.1} parent=0 // loop_header_branch
    %19 = sbr.rel (%p17) target = $region8
  $region5: #{tpu_custom_call.1} parent=0 // loop_body
    %s21 = ssub.s32 %s16, 1
    %s22 = ssub.s32 %s16, 2
    %s23 = sadd.s32 %s16, 1
    %s24 = ssub.s32 %s16, %s23
    %p25 = scmp.eq.s32.totalorder %s24, 0
    %s27 = sadd.s32 %s26, 1
    %s28 = scalar_select %p25, %s26, %s27
    %p31 = pneg %p25
    %p32 = scmp.eq.s32.totalorder %s16, 1
    %p33 = por %p31, %p32
    %p34 = scmp.ne.s32.totalorder %s26, %s29
    %p35 = scmp.eq.s32.totalorder %s16, 0
    %p36 = por %p34, %p35
    %p37 = scmp.ne.s32.totalorder %s26, %s29
    %p38 = scmp.eq.s32.totalorder %s21, 1
    %p39 = por %p37, %p38
    %p40 = scmp.ne.s32.totalorder %s29, %s30
    %p41 = scmp.eq.s32.totalorder %s21, 0
    %p42 = por %p40, %p41
    %p43 = scmp.ne.s32.totalorder %s29, %s30
    %p44 = scmp.eq.s32.totalorder %s22, 1
    %p45 = por %p43, %p44
    %p47 = scmp.ne.s32.totalorder %s30, %s46
    %p48 = scmp.eq.s32.totalorder %s22, 0
    %p49 = por %p47, %p48
    %s50 = ssub.s32 %s16, %s23
    %p51 = scmp.eq.s32.totalorder %s50, 0
    %s53 = sadd.s32 %s52, 1
    %s54 = scalar_select %p51, %s52, %s53
    %p57 = pneg %p51
    %p58 = scmp.eq.s32.totalorder %s16, 1
    %p59 = por %p57, %p58
    %p60 = scmp.ne.s32.totalorder %s52, %s55
    %p61 = scmp.eq.s32.totalorder %s16, 0
    %p62 = por %p60, %p61
    %p63 = scmp.ne.s32.totalorder %s52, %s55
    %p64 = scmp.eq.s32.totalorder %s21, 1
    %p65 = por %p63, %p64
    %p66 = scmp.ne.s32.totalorder %s55, %s56
    %p67 = scmp.eq.s32.totalorder %s21, 0
    %p68 = por %p66, %p67
    %p69 = scmp.ne.s32.totalorder %s55, %s56
    %p70 = scmp.eq.s32.totalorder %s22, 1
    %p71 = por %p69, %p70
    %p73 = scmp.ne.s32.totalorder %s56, %s72
    %p74 = scmp.eq.s32.totalorder %s22, 0
    %p75 = por %p73, %p74
    %s77 = sadd.s32 %s76, 1
    %p80 = scmp.eq.s32.totalorder %s16, 1
    %p81 = scmp.ne.s32.totalorder %s76, %s78
    %p82 = scmp.eq.s32.totalorder %s16, 0
    %p83 = por %p81, %p82
    %p84 = scmp.ne.s32.totalorder %s76, %s78
    %p85 = scmp.eq.s32.totalorder %s21, 1
    %p86 = por %p84, %p85
    %p87 = scmp.ne.s32.totalorder %s78, %s79
    %p88 = scmp.eq.s32.totalorder %s21, 0
    %p89 = por %p87, %p88
    %p90 = scmp.ne.s32.totalorder %s78, %s79
    %p91 = scmp.eq.s32.totalorder %s22, 1
    %p92 = por %p90, %p91
    %p94 = scmp.ne.s32.totalorder %s79, %s93
    %p95 = scmp.eq.s32.totalorder %s22, 0
    %p96 = por %p94, %p95
    %s98 = sadd.s32 %s97, 1
    %p101 = scmp.eq.s32.totalorder %s16, 1
    %p102 = scmp.ne.s32.totalorder %s97, %s99
    %p103 = scmp.eq.s32.totalorder %s16, 0
    %p104 = por %p102, %p103
    %p105 = scmp.ne.s32.totalorder %s97, %s99
    %p106 = scmp.eq.s32.totalorder %s21, 1
    %p107 = por %p105, %p106
    %p108 = scmp.ne.s32.totalorder %s99, %s100
    %p109 = scmp.eq.s32.totalorder %s21, 0
    %p110 = por %p108, %p109
    %p111 = scmp.ne.s32.totalorder %s99, %s100
    %p112 = scmp.eq.s32.totalorder %s22, 1
    %p113 = por %p111, %p112
    %p115 = scmp.ne.s32.totalorder %s100, %s114
    %p116 = scmp.eq.s32.totalorder %s22, 0
    %p117 = por %p115, %p116
    %s119 = sadd.s32 %s118, 1
    %p122 = scmp.eq.s32.totalorder %s16, 1
    %p123 = scmp.ne.s32.totalorder %s118, %s120
    %p124 = scmp.eq.s32.totalorder %s16, 0
    %p125 = por %p123, %p124
    %p126 = scmp.ne.s32.totalorder %s118, %s120
    %p127 = scmp.eq.s32.totalorder %s21, 1
    %p128 = por %p126, %p127
    %p129 = scmp.ne.s32.totalorder %s120, %s121
    %p130 = scmp.eq.s32.totalorder %s21, 0
    %p131 = por %p129, %p130
    %p132 = scmp.ne.s32.totalorder %s120, %s121
    %p133 = scmp.eq.s32.totalorder %s22, 1
    %p134 = por %p132, %p133
    %p136 = scmp.ne.s32.totalorder %s121, %s135
    %p137 = scmp.eq.s32.totalorder %s22, 0
    %p138 = por %p136, %p137
    %s140 = sadd.s32 %s139, 1
    %p143 = scmp.eq.s32.totalorder %s16, 1
    %p144 = scmp.ne.s32.totalorder %s139, %s141
    %p145 = scmp.eq.s32.totalorder %s16, 0
    %p146 = por %p144, %p145
    %p147 = scmp.ne.s32.totalorder %s139, %s141
    %p148 = scmp.eq.s32.totalorder %s21, 1
    %p149 = por %p147, %p148
    %p150 = scmp.ne.s32.totalorder %s141, %s142
    %p151 = scmp.eq.s32.totalorder %s21, 0
    %p152 = por %p150, %p151
    %p153 = scmp.ne.s32.totalorder %s141, %s142
    %p154 = scmp.eq.s32.totalorder %s22, 1
    %p155 = por %p153, %p154
    %p157 = scmp.ne.s32.totalorder %s142, %s156
    %p158 = scmp.eq.s32.totalorder %s22, 0
    %p159 = por %p157, %p158
    %s161 = sadd.s32 %s160, 1
    %p164 = scmp.eq.s32.totalorder %s16, 1
    %p165 = scmp.ne.s32.totalorder %s160, %s162
    %p166 = scmp.eq.s32.totalorder %s16, 0
    %p167 = por %p165, %p166
    %p168 = scmp.ne.s32.totalorder %s160, %s162
    %p169 = scmp.eq.s32.totalorder %s21, 1
    %p170 = por %p168, %p169
    %p171 = scmp.ne.s32.totalorder %s162, %s163
    %p172 = scmp.eq.s32.totalorder %s21, 0
    %p173 = por %p171, %p172
    %p174 = scmp.ne.s32.totalorder %s162, %s163
    %p175 = scmp.eq.s32.totalorder %s22, 1
    %p176 = por %p174, %p175
    %p178 = scmp.ne.s32.totalorder %s163, %s177
    %p179 = scmp.eq.s32.totalorder %s22, 0
    %p180 = por %p178, %p179
    %s182 = sadd.s32 %s181, 1
    %p185 = scmp.eq.s32.totalorder %s16, 1
    %p186 = scmp.ne.s32.totalorder %s181, %s183
    %p187 = scmp.eq.s32.totalorder %s16, 0
    %p188 = por %p186, %p187
    %p189 = scmp.ne.s32.totalorder %s181, %s183
    %p190 = scmp.eq.s32.totalorder %s21, 1
    %p191 = por %p189, %p190
    %p192 = scmp.ne.s32.totalorder %s183, %s184
    %p193 = scmp.eq.s32.totalorder %s21, 0
    %p194 = por %p192, %p193
    %p195 = scmp.ne.s32.totalorder %s183, %s184
    %p196 = scmp.eq.s32.totalorder %s22, 1
    %p197 = por %p195, %p196
    %p199 = scmp.ne.s32.totalorder %s184, %s198
    %p200 = scmp.eq.s32.totalorder %s22, 0
    %p201 = por %p199, %p200
    %s202 = ssub.s32 %s16, %s23
    %p203 = scmp.eq.s32.totalorder %s202, 0
    %s205 = sadd.s32 %s204, 1
    %s206 = scalar_select %p203, %s204, %s205
    %p209 = pneg %p203
    %p210 = scmp.eq.s32.totalorder %s16, 1
    %p211 = por %p209, %p210
    %p212 = scmp.ne.s32.totalorder %s204, %s207
    %p213 = scmp.eq.s32.totalorder %s16, 0
    %p214 = por %p212, %p213
    %p215 = scmp.ne.s32.totalorder %s204, %s207
    %p216 = scmp.eq.s32.totalorder %s21, 1
    %p217 = por %p215, %p216
    %p218 = scmp.ne.s32.totalorder %s207, %s208
    %p219 = scmp.eq.s32.totalorder %s21, 0
    %p220 = por %p218, %p219
    %p221 = scmp.ne.s32.totalorder %s207, %s208
    %p222 = scmp.eq.s32.totalorder %s22, 1
    %p223 = por %p221, %p222
    %p225 = scmp.ne.s32.totalorder %s208, %s224
    %p226 = scmp.eq.s32.totalorder %s22, 0
    %p227 = por %p225, %p226
    %p228 = scmp.le.s32.totalorder 1, %s16
    %p229 = scmp.lt.s32.totalorder %s16, 3
    %p230 = pnand %p228, %p229
    %p231 = pneg %p230
    // Predicated region
    $region9: #{tpu_custom_call.1} parent=5 // pred_check
      _
    $region10: #{tpu_custom_call.1} parent=5 // pred_check_branch
      %233 = sbr.rel (%p230) target = $region12
    $region11: #{tpu_custom_call.1} parent=5 // pred_region
      %s234 = ssub.s32 %s16, 1
      // Predicated region
      $region13: #{tpu_custom_call.1} parent=11 // pred_check
        %p235 = pneg %p89
      $region14: #{tpu_custom_call.1} parent=11 // pred_check_branch
        %237 = sbr.rel (%p235) target = $region16
      $region15: #{tpu_custom_call.1} parent=11 // pred_region
        _
      $region16: #{tpu_custom_call.1} parent=11 // pred_fallthru
        _
      // Predicated region
      $region17: #{tpu_custom_call.1} parent=11 // pred_check
        %p238 = pneg %p110
      $region18: #{tpu_custom_call.1} parent=11 // pred_check_branch
        %240 = sbr.rel (%p238) target = $region20
      $region19: #{tpu_custom_call.1} parent=11 // pred_region
        _
      $region20: #{tpu_custom_call.1} parent=11 // pred_fallthru
        _
      // Predicated region
      $region21: #{tpu_custom_call.1} parent=11 // pred_check
        %p241 = pneg %p131
      $region22: #{tpu_custom_call.1} parent=11 // pred_check_branch
        %243 = sbr.rel (%p241) target = $region24
      $region23: #{tpu_custom_call.1} parent=11 // pred_region
        _
      $region24: #{tpu_custom_call.1} parent=11 // pred_fallthru
        _
      // Predicated region
      $region25: #{tpu_custom_call.1} parent=11 // pred_check
        %p244 = pneg %p152
      $region26: #{tpu_custom_call.1} parent=11 // pred_check_branch
        %246 = sbr.rel (%p244) target = $region28
      $region27: #{tpu_custom_call.1} parent=11 // pred_region
        _
      $region28: #{tpu_custom_call.1} parent=11 // pred_fallthru
        _
      // Predicated region
      $region29: #{tpu_custom_call.1} parent=11 // pred_check
        %p247 = pneg %p173
      $region30: #{tpu_custom_call.1} parent=11 // pred_check_branch
        %249 = sbr.rel (%p247) target = $region32
      $region31: #{tpu_custom_call.1} parent=11 // pred_region
        _
      $region32: #{tpu_custom_call.1} parent=11 // pred_fallthru
        _
      // Predicated region
      $region33: #{tpu_custom_call.1} parent=11 // pred_check
        %p250 = pneg %p194
      $region34: #{tpu_custom_call.1} parent=11 // pred_check_branch
        %252 = sbr.rel (%p250) target = $region36
      $region35: #{tpu_custom_call.1} parent=11 // pred_region
        _
      $region36: #{tpu_custom_call.1} parent=11 // pred_fallthru
        _
    $region12: #{tpu_custom_call.1} parent=5 // pred_fallthru
      _
    %p253 = scmp.lt.s32.totalorder %s16, 2
    // Predicated region
    $region37: #{tpu_custom_call.1} parent=5 // pred_check
      %p254 = pneg %p253
    $region38: #{tpu_custom_call.1} parent=5 // pred_check_branch
      %256 = sbr.rel (%p254) target = $region40
    $region39: #{tpu_custom_call.1} parent=5 // pred_region
      // Predicated region
      $region41: #{tpu_custom_call.1} parent=39 // pred_check
        %p257 = pneg %p36
      $region42: #{tpu_custom_call.1} parent=39 // pred_check_branch
        %259 = sbr.rel (%p257) target = $region44
      $region43: #{tpu_custom_call.1} parent=39 // pred_region
        %s260 = smul.u32 3, %s16
        %p261 = scmp.lt.s32.totalorder %s260, 5
        %s262 = scalar_select %p261, %s260, 5
        %s263 = smul.addr %s262, 8
        %s264 = scalar_lea.vmem %s0, %s263
        %s265 = smul.u32 3, %s16
      $region44: #{tpu_custom_call.1} parent=39 // pred_fallthru
        _
      // Predicated region
      $region45: #{tpu_custom_call.1} parent=39 // pred_check
        %p266 = pneg %p62
      $region46: #{tpu_custom_call.1} parent=39 // pred_check_branch
        %268 = sbr.rel (%p266) target = $region48
      $region47: #{tpu_custom_call.1} parent=39 // pred_region
        %s269 = smul.u32 3, %s16
        %p270 = scmp.lt.s32.totalorder %s269, 5
        %s271 = scalar_select %p270, %s269, 5
        %s272 = smul.addr %s271, 8
        %s273 = scalar_lea.vmem %s1, %s272
        %s274 = smul.u32 3, %s16
      $region48: #{tpu_custom_call.1} parent=39 // pred_fallthru
        _
    $region40: #{tpu_custom_call.1} parent=5 // pred_fallthru
      _
    %p275 = scmp.le.s32.totalorder 1, %s16
    %p276 = scmp.lt.s32.totalorder %s16, 3
    %p277 = pnand %p275, %p276
    %p278 = pneg %p277
    // Predicated region
    $region49: #{tpu_custom_call.1} parent=5 // pred_check
      _
    $region50: #{tpu_custom_call.1} parent=5 // pred_check_branch
      %280 = sbr.rel (%p277) target = $region52
    $region51: #{tpu_custom_call.1} parent=5 // pred_region
      %s281 = ssub.s32 %s16, 1
      %s282 = smul.u32 3, %s21
      %p283 = scmp.lt.s32.totalorder %s282, 5
      %s284 = scalar_select %p283, %s282, 5
      %s285 = smul.addr %s284, 8
      %s286 = scalar_lea.vmem %s0, %s285
      %p287 = pneg %p42
      %p288 = pneg %p39
      %s289 = smul.u32 3, %s21
      %p290 = scmp.lt.s32.totalorder %s289, 5
      %s291 = scalar_select %p290, %s289, 5
      %s292 = smul.addr %s291, 8
      %s293 = scalar_lea.vmem %s1, %s292
      %p294 = pneg %p68
      %p295 = pneg %p65
      %p296 = pneg %p89
      %p297 = pneg %p86
      %p298 = pneg %p110
      %p299 = pneg %p107
      %p300 = pneg %p131
      %p301 = pneg %p128
      %p302 = pneg %p152
      %p303 = pneg %p149
      %p304 = pneg %p173
      %p305 = pneg %p170
      %p306 = pneg %p194
      %p307 = pneg %p191
      %p308 = pneg %p220
      %p309 = pneg %p217
      %s310 = smul.u32 3, %s21
      %p311 = scmp.lt.s32.totalorder %s310, 5
      %s312 = scalar_select %p311, %s310, 5
      %s313 = smul.addr %s312, 8
      %s314 = scalar_lea.vmem %s8, %s313
      %s315 = smul.u32 3, %s21
      %p316 = scmp.lt.s32.totalorder %s315, 5
      %s317 = scalar_select %p316, %s315, 5
      %s318 = smul.addr %s317, 8
      %s319 = scalar_lea.vmem %s0, %s318
      %s320 = smul.u32 3, %s21
      %s321 = smul.u32 3, %s21
      %p322 = scmp.lt.s32.totalorder %s321, 5
      %s323 = scalar_select %p322, %s321, 5
      %s324 = smul.addr %s323, 8
      %s325 = scalar_lea.vmem %s1, %s324
      %s326 = smul.u32 3, %s21
      %s327 = smul.u32 3, %s21
      %p328 = scmp.lt.s32.totalorder %s327, 5
      %s329 = scalar_select %p328, %s327, 5
      %s330 = smul.addr %s329, 8
      %s331 = scalar_lea.vmem %s8, %s330
      %s332 = smul.u32 3, %s21
      %v334 = vld [vmem:[%s319] sm:$0xff]
      %v335 = vld [vmem:[%s319 + $0x8] sm:$0xff]
      %v336 = vld [vmem:[%s319 + $0x10] sm:$0xff]
      %v337 = vld [vmem:[%s325] sm:$0xff]
      %v338 = vld [vmem:[%s325 + $0x8] sm:$0xff]
      %v339 = vld [vmem:[%s325 + $0x10] sm:$0xff]
      %v340 = vlaneseq
      %v341 = vand.u32 %v340, 127
      %342 = vset.pattern.permute.xlu0 0
      %343 = vperm.xlu0 %342, %v334
      %v344 = vpop.permute.xlu0 %343
      %345 = vset.pattern.permute.xlu0 0
      %346 = vperm.xlu0 %345, %v335
      %v347 = vpop.permute.xlu0 %346
      %348 = vset.pattern.permute.xlu0 0
      %349 = vperm.xlu0 %348, %v336
      %v350 = vpop.permute.xlu0 %349
      %vm351 = vcmp.eq.s32.totalorder %v344, %v341
      %vm352 = vcmp.eq.s32.totalorder %v347, %v341
      %vm353 = vcmp.eq.s32.totalorder %v350, %v341
      %v354 = vsel %vm351, 1.0, 0.0
      %v355 = vsel %vm352, 1.0, 0.0
      %v356 = vsel %vm353, 1.0, 0.0
      %v357 = vpack.c.bf16 %v355, %v354
      %v358 = vpack.c.bf16 %v356, %v356
      %359 = vset.pattern.permute.xlu0 0
      %360 = vperm.xlu0 %359, %v337
      %v361 = vpop.permute.xlu0 %360
      %362 = vset.pattern.permute.xlu0 0
      %363 = vperm.xlu0 %362, %v338
      %v364 = vpop.permute.xlu0 %363
      %365 = vset.pattern.permute.xlu0 0
      %366 = vperm.xlu0 %365, %v339
      %v367 = vpop.permute.xlu0 %366
      %vm368 = vcmp.eq.s32.totalorder %v361, %v341
      %vm369 = vcmp.eq.s32.totalorder %v364, %v341
      %vm370 = vcmp.eq.s32.totalorder %v367, %v341
      %v371 = vsel %vm368, 1.0, 0.0
      %v372 = vsel %vm369, 1.0, 0.0
      %v373 = vsel %vm370, 1.0, 0.0
      %v374 = vpack.c.bf16 %v372, %v371
      %v375 = vpack.c.bf16 %v373, %v373
      %v376 = vld [vmem:[%s2] sm:$0xf]
      %v377 = vld [vmem:[%s3] sm:$0xf]
      %vm378 = vcmask 64512
      %v380 = vsel %vm378, %v374, 0
      %v383 = vsel %vm378, %v375, 0
      %vm385 = vcmask 1043456
      %v387 = vsel %vm385, %v377, 0
      %389 = vmatprep.subr.bf16.mxu0 0
      %390 = vmatpush1.bf16.msra.mxu0 0
      %391 = vmatprep.subr.bf16.mxu0 0
      %392 = vmatpush1.bf16.msra.mxu0 0
      %393 = vmatprep.subr.bf16.mxu0 0
      %394 = vmatpush1.bf16.msra.mxu0 0
      %395 = vmatprep.subr.bf16.mxu0 0
      %396 = vmatpush1.bf16.msra.mxu0 0
      %397 = vmatprep.subr.bf16.mxu0 0
      %398 = vmatpush1.bf16.msra.mxu0 0
      %399 = vmatprep.subr.bf16.mxu0 0
      %400 = vmatpush1.bf16.msra.mxu0 0
      %401 = vmatprep.subr.bf16.mxu0 0
      %402 = vmatpush1.bf16.msra.mxu0 0
      %403 = vmatprep.subr.bf16.mxu0 0
      %404 = vmatpush1.bf16.msra.mxu0 %v387
      %405 = vmatprep.subr.bf16.mxu0 0
      %406 = vmatpush2.bf16.msra.mxu0 0
      %407 = vmatprep.subr.bf16.mxu0 0
      %408 = vmatpush2.bf16.msra.mxu0 0
      %409 = vmatprep.subr.bf16.mxu0 0
      %410 = vmatpush2.bf16.msra.mxu0 0
      %411 = vmatprep.subr.bf16.mxu0 0
      %412 = vmatpush2.bf16.msra.mxu0 0
      %413 = vmatprep.subr.bf16.mxu0 0
      %414 = vmatpush2.bf16.msra.mxu0 0
      %415 = vmatprep.subr.bf16.mxu0 0
      %416 = vmatpush2.bf16.msra.mxu0 0
      %417 = vmatprep.subr.bf16.mxu0 0
      %418 = vmatpush2.bf16.msra.mxu0 0
      %419 = vmatprep.subr.bf16.mxu0 0
      %420 = vmatpush2.bf16.msra.mxu0 0
      %421 = vmatprep.mubr.bf16.mxu0 0
      %422 = vmatmul.mubr.bf16.gmra.mxu0 %v380
      %v423 = vpop.f32.mrf.mxu0
      %v424 = vadd.f32 0.0, %v423
      %v425 = vpop.f32.mrf.mxu0
      %v426 = vpop.f32.mrf.mxu0
      %v427 = vadd.f32 0.0, %v426
      %v428 = vpop.f32.mrf.mxu0
      %429 = vmatprep.mubr.bf16.mxu0 0
      %430 = vmatmul.mubr.bf16.gmra.mxu0 %v383
      %v431 = vpop.f32.mrf.mxu0
      %v432 = vadd.f32 0.0, %v431
      %v433 = vpop.f32.mrf.mxu0
      %v434 = vpop.f32.mrf.mxu0
      %v435 = vpop.f32.mrf.mxu0
      %436 = vdwg.mxu0
      %v438 = vsel %vm378, %v357, 0
      %v441 = vsel %vm378, %v358, 0
      %v444 = vsel %vm385, %v376, 0
      %446 = vmatprep.subr.bf16.mxu0 0
      %447 = vmatpush1.bf16.msra.mxu0 0
      %448 = vmatprep.subr.bf16.mxu0 0
      %449 = vmatpush1.bf16.msra.mxu0 0
      %450 = vmatprep.subr.bf16.mxu0 0
      %451 = vmatpush1.bf16.msra.mxu0 0
      %452 = vmatprep.subr.bf16.mxu0 0
      %453 = vmatpush1.bf16.msra.mxu0 0
      %454 = vmatprep.subr.bf16.mxu0 0
      %455 = vmatpush1.bf16.msra.mxu0 0
      %456 = vmatprep.subr.bf16.mxu0 0
      %457 = vmatpush1.bf16.msra.mxu0 0
      %458 = vmatprep.subr.bf16.mxu0 0
      %459 = vmatpush1.bf16.msra.mxu0 0
      %460 = vmatprep.subr.bf16.mxu0 0
      %461 = vmatpush1.bf16.msra.mxu0 %v444
      %462 = vmatprep.subr.bf16.mxu0 0
      %463 = vmatpush2.bf16.msra.mxu0 0
      %464 = vmatprep.subr.bf16.mxu0 0
      %465 = vmatpush2.bf16.msra.mxu0 0
      %466 = vmatprep.subr.bf16.mxu0 0
      %467 = vmatpush2.bf16.msra.mxu0 0
      %468 = vmatprep.subr.bf16.mxu0 0
      %469 = vmatpush2.bf16.msra.mxu0 0
      %470 = vmatprep.subr.bf16.mxu0 0
      %471 = vmatpush2.bf16.msra.mxu0 0
      %472 = vmatprep.subr.bf16.mxu0 0
      %473 = vmatpush2.bf16.msra.mxu0 0
      %474 = vmatprep.subr.bf16.mxu0 0
      %475 = vmatpush2.bf16.msra.mxu0 0
      %476 = vmatprep.subr.bf16.mxu0 0
      %477 = vmatpush2.bf16.msra.mxu0 0
      %478 = vmatprep.mubr.bf16.mxu0 0
      %479 = vmatmul.mubr.bf16.gmra.mxu0 %v438
      %v480 = vpop.f32.mrf.mxu0
      %v481 = vadd.f32 %v424, %v480
      %v482 = vpop.f32.mrf.mxu0
      %v483 = vpop.f32.mrf.mxu0
      %v484 = vadd.f32 %v427, %v483
      %v485 = vpop.f32.mrf.mxu0
      %486 = vmatprep.mubr.bf16.mxu0 0
      %487 = vmatmul.mubr.bf16.gmra.mxu0 %v441
      %v488 = vpop.f32.mrf.mxu0
      %v489 = vadd.f32 %v432, %v488
      %v490 = vpop.f32.mrf.mxu0
      %v491 = vpop.f32.mrf.mxu0
      %v492 = vpop.f32.mrf.mxu0
      %493 = vdwg.mxu0
      %vm494 = vcmp.gt.f32.partialorder %v481, 0.0
      %vm495 = vcmp.gt.f32.partialorder %v484, 0.0
      %vm496 = vcmp.gt.f32.partialorder %v489, 0.0
      %v497 = vmul.f32 %v481, 0.01
      %v498 = vmul.f32 %v484, 0.01
      %v499 = vmul.f32 %v489, 0.01
      %v500 = vsel %vm494, %v481, %v497
      %v501 = vsel %vm495, %v484, %v498
      %v502 = vsel %vm496, %v489, %v499
      %v503 = vpack.c.bf16 %v501, %v500
      %v504 = vpack.c.bf16 %v502, %v502
      %v505 = vld [vmem:[%s4] sm:$0xf]
      %v506 = vld [vmem:[%s4 + $0x4] sm:$0xf]
      %v507 = vld [vmem:[%s4 + $0x8] sm:$0xf]
      %v508 = vld [vmem:[%s4 + $0xc] sm:$0xf]
      %v509 = vld [vmem:[%s5] sm:$0x1]
      %v511 = vlaneseq
      %v512 = vshrl.u32 %v511, 7
      %v513 = vsub.s32 0, %v512
      %v514 = vrot.slane %v509, %v513
      %v520 = vunpack.c.l.b16 %v505
      %v521 = vunpack.c.l.b16 %v506
      %v522 = vunpack.c.l.b16 %v507
      %v523 = vunpack.c.l.b16 %v508
      %v524 = vpack.c.b16 %v521, %v520
      %v525 = vpack.c.b16 %v523, %v522
      %vm528 = vcmask 261120
      %v530 = vsel %vm528, %v503, 0
      %v533 = vsel %vm528, %v504, 0
      %535 = vmatprep.subr.bf16.mxu0 0
      %536 = vmatpush1.bf16.msra.mxu0 0
      %537 = vmatprep.subr.bf16.mxu0 0
      %538 = vmatpush1.bf16.msra.mxu0 0
      %539 = vmatprep.subr.bf16.mxu0 0
      %540 = vmatpush1.bf16.msra.mxu0 0
      %541 = vmatprep.subr.bf16.mxu0 0
      %542 = vmatpush1.bf16.msra.mxu0 0
      %543 = vmatprep.subr.bf16.mxu0 0
      %544 = vmatpush1.bf16.msra.mxu0 0
      %545 = vmatprep.subr.bf16.mxu0 0
      %546 = vmatpush1.bf16.msra.mxu0 0
      %547 = vmatprep.subr.bf16.mxu0 0
      %548 = vmatpush1.bf16.msra.mxu0 %v525
      %549 = vmatprep.subr.bf16.mxu0 0
      %550 = vmatpush1.bf16.msra.mxu0 %v524
      %551 = vmatprep.subr.bf16.mxu0 0
      %552 = vmatpush2.bf16.msra.mxu0 0
      %553 = vmatprep.subr.bf16.mxu0 0
      %554 = vmatpush2.bf16.msra.mxu0 0
      %555 = vmatprep.subr.bf16.mxu0 0
      %556 = vmatpush2.bf16.msra.mxu0 0
      %557 = vmatprep.subr.bf16.mxu0 0
      %558 = vmatpush2.bf16.msra.mxu0 0
      %559 = vmatprep.subr.bf16.mxu0 0
      %560 = vmatpush2.bf16.msra.mxu0 0
      %561 = vmatprep.subr.bf16.mxu0 0
      %562 = vmatpush2.bf16.msra.mxu0 0
      %563 = vmatprep.subr.bf16.mxu0 0
      %564 = vmatpush2.bf16.msra.mxu0 0
      %565 = vmatprep.subr.bf16.mxu0 0
      %566 = vmatpush2.bf16.msra.mxu0 0
      %567 = vmatprep.mubr.bf16.mxu0 0
      %568 = vmatmul.mubr.bf16.gmra.mxu0 %v530
      %v569 = vpop.f32.mrf.mxu0
      %v570 = vadd.f32 %v514, %v569
      %v571 = vpop.f32.mrf.mxu0
      %v572 = vpop.f32.mrf.mxu0
      %v573 = vadd.f32 %v514, %v572
      %v574 = vpop.f32.mrf.mxu0
      %575 = vmatprep.mubr.bf16.mxu0 0
      %576 = vmatmul.mubr.bf16.gmra.mxu0 %v533
      %v577 = vpop.f32.mrf.mxu0
      %v578 = vadd.f32 %v514, %v577
      %v579 = vpop.f32.mrf.mxu0
      %v580 = vpop.f32.mrf.mxu0
      %v581 = vpop.f32.mrf.mxu0
      %582 = vdwg.mxu0
      %vm583 = vcmp.gt.f32.partialorder %v570, 0.0
      %vm584 = vcmp.gt.f32.partialorder %v573, 0.0
      %vm585 = vcmp.gt.f32.partialorder %v578, 0.0
      %v586 = vmul.f32 %v570, 0.01
      %v587 = vmul.f32 %v573, 0.01
      %v588 = vmul.f32 %v578, 0.01
      %v589 = vsel %vm583, %v570, %v586
      %v590 = vsel %vm584, %v573, %v587
      %v591 = vsel %vm585, %v578, %v588
      %v592 = vld [vmem:[%s6] sm:$0x1]
      %v594 = vlaneseq
      %v595 = vshrl.u32 %v594, 7
      %v596 = vsub.s32 0, %v595
      %v597 = vrot.slane %v592, %v596
      %v599 = vmul.f32 %v589, %v597
      %v600 = vmul.f32 %v590, %v597
      %v601 = vmul.f32 %v591, %v597
      %vm602 = vcmask 130048
      %v603 = vsel %vm602, %v599, 0.0
      %604 = vadd.xlane.f32.xlu0 %v603
      %v605 = vpop.xlane.xlu0 %604
      %v606 = vsel %vm602, %v600, 0.0
      %607 = vadd.xlane.f32.xlu0 %v606
      %v608 = vpop.xlane.xlu0 %607
      %v609 = vsel %vm602, %v601, 0.0
      %610 = vadd.xlane.f32.xlu0 %v609
      %v611 = vpop.xlane.xlu0 %610
      %v612 = vld [vmem:[#allocation2] sm:$0x1]
      %v614 = vlaneseq
      %v615 = vshrl.u32 %v614, 7
      %v616 = vsub.s32 0, %v615
      %v617 = vrot.slane %v612, %v616
      %v619 = vadd.f32 %v605, %v617
      %v620 = vadd.f32 %v608, %v617
      %v621 = vadd.f32 %v611, %v617
      %v622 = vxor.u32 %v619, 2147483648
      %v623 = vxor.u32 %v620, 2147483648
      %v624 = vxor.u32 %v621, 2147483648
      %v625 = vmul.f32 %v622, 1.442695
      %v626 = vpow.pop %v625
      %v627 = vmul.f32 %v623, 1.442695
      %v628 = vpow.pop %v627
      %v629 = vmul.f32 %v624, 1.442695
      %v630 = vpow.pop %v629
      %v631 = vadd.f32 %v626, 1.0
      %v632 = vadd.f32 %v628, 1.0
      %v633 = vadd.f32 %v630, 1.0
      %v634 = vrcp.pop %v631
      %v635 = vmul.f32 1.0, %v634
      %v636 = vrcp.pop %v632
      %v637 = vmul.f32 1.0, %v636
      %v638 = vrcp.pop %v633
      %v639 = vmul.f32 1.0, %v638
      %v640 = vsub.f32 1.0, %v635
      %v641 = vsub.f32 1.0, %v637
      %v642 = vsub.f32 1.0, %v639
      %646 = vrot.lane.b32.xlu0 %v640, 1
      %v647 = vpop.permute.xlu0 %646
      %648 = vrot.lane.b32.xlu0 %v641, 1
      %v649 = vpop.permute.xlu0 %648
      %650 = vrot.lane.b32.xlu0 %v642, 1
      %v651 = vpop.permute.xlu0 %650
      %vm655 = vcmask 7168
      %v656 = vsel %vm655, %v635, %v647
      %v657 = vsel %vm655, %v637, %v649
      %v658 = vsel %vm655, %v639, %v651
      %vm659 = vcmask 15360
      %660 = vst.msk [vmem:[%s331] sm:$0xff] %vm659, %v656
      %661 = vst.msk [vmem:[%s331 + $0x8] sm:$0xff] %vm659, %v657
      %662 = vst.msk [vmem:[%s331 + $0x10] sm:$0xff] %vm659, %v658
      %s663 = smul.u32 3, %s21
      %p664 = scmp.lt.s32.totalorder %s663, 5
      %s665 = scalar_select %p664, %s663, 5
      %s666 = smul.addr %s665, 8
      %s667 = scalar_lea.vmem %s8, %s666
      // Predicated region
      $region53: #{tpu_custom_call.1} parent=51 // pred_check
        %p668 = pneg %p217
      $region54: #{tpu_custom_call.1} parent=51 // pred_check_branch
        %670 = sbr.rel (%p668) target = $region56
      $region55: #{tpu_custom_call.1} parent=51 // pred_region
        %s671 = smul.u32 3, %s21
      $region56: #{tpu_custom_call.1} parent=51 // pred_fallthru
        _
    $region52: #{tpu_custom_call.1} parent=5 // pred_fallthru
      _
    %p672 = scmp.le.s32.totalorder 2, %s16
    // Predicated region
    $region57: #{tpu_custom_call.1} parent=5 // pred_check
      %p673 = pneg %p672
    $region58: #{tpu_custom_call.1} parent=5 // pred_check_branch
      %675 = sbr.rel (%p673) target = $region60
    $region59: #{tpu_custom_call.1} parent=5 // pred_region
      %s676 = ssub.s32 %s16, 2
      // Predicated region
      $region61: #{tpu_custom_call.1} parent=59 // pred_check
        %p677 = pneg %p223
      $region62: #{tpu_custom_call.1} parent=59 // pred_check_branch
        %679 = sbr.rel (%p677) target = $region64
      $region63: #{tpu_custom_call.1} parent=59 // pred_region
        %s680 = smul.u32 3, %s22
        %p681 = scmp.lt.s32.totalorder %s680, 5
        %s682 = scalar_select %p681, %s680, 5
        %s683 = smul.addr %s682, 8
        %s684 = scalar_lea.vmem %s8, %s683
      $region64: #{tpu_custom_call.1} parent=59 // pred_fallthru
        _
    $region60: #{tpu_custom_call.1} parent=5 // pred_fallthru
      _
  $region6: #{tpu_custom_call.1} parent=0 // loop_footer
    %s20 = sadd.s32 1, %s16
  $region7: #{tpu_custom_call.1} parent=0 // loop_footer_branch
    %15 = sbr.rel target = $region3
  $region8: #{tpu_custom_call.1} parent=0 // loop_exit
    _

</llo_original>
